<compile_context>
chip_gen: v6e
topology: v6e:2x2x1
jax: 0.10.0
libtpu: 0.0.40
codegen_flags: <defaults>
</compile_context>

<pallas_src>
import functools

import jax
import jax.numpy as jnp
from jax.experimental import pallas as pl
from jax.experimental.pallas import tpu as pltpu


def _pick_lane_tile(rows: int, cols: int, itemsize: int,
                    budget_bytes: int = 8 * 1024 * 1024) -> int:
    """Lane-axis tile width: a multiple of 128 that divides `cols` and keeps a
    (rows x tile) block under ~budget_bytes (so double-buffering fits scoped
    VMEM on v5e/v6e/v7x).  Falls back to the full dimension for small or
    non-128-aligned shapes (full-dim blocks are always legal)."""
    if cols % 128 != 0:
        return cols
    max_t = max(128, (budget_bytes // max(rows * itemsize, 1)) // 128 * 128)
    t = min(cols, max_t)
    t = max(128, (t // 128) * 128)
    while t > 128 and cols % t != 0:
        t -= 128
    return t if cols % t == 0 else cols


def _obj_to_rank_kernel(obj_ref, bias_ref, u_ref, q_ref, *, inv_batch: float):
    # obj_ref : (B, H)  full block (block index constant -> DMA'd once, resident)
    # bias_ref: (1, H)  full block
    # u_ref   : (H, tR) double-buffered tile of u for this grid step
    # q_ref   : (1, tR) output tile of q = (mean(obj) - bias) @ u
    #
    # Batch-mean first (commutes with the linear maps).  Recomputed per R-tile:
    # at LRE batch sizes (a handful of prompts) this VPU work hides under the
    # u-tile DMA; for very large B pre-reduce in the wrapper instead.
    mean_obj = (jnp.sum(obj_ref[...].astype(jnp.float32), axis=0, keepdims=True)
                * inv_batch
                - bias_ref[...].astype(jnp.float32))                      # (1, H)
    q_ref[...] = jnp.dot(mean_obj.astype(u_ref.dtype), u_ref[...],
                         preferred_element_type=jnp.float32)              # (1, tR)


def _rank_to_subject_kernel(q_ref, vst_ref, out_ref):
    # q_ref  : (1, R)   full block (rank-space vector, f32, resident)
    # vst_ref: (R, tH)  double-buffered tile of vst = (v * 1/s).T
    # out_ref: (1, tH)  output tile (lane-dense in H)
    out_ref[...] = jnp.dot(q_ref[...].astype(vst_ref.dtype), vst_ref[...],
                           preferred_element_type=jnp.float32
                           ).astype(out_ref.dtype)


def inverted_lre_forward(object_activations: jax.Array,
                         u: jax.Array,
                         s: jax.Array,
                         v: jax.Array,
                         bias: jax.Array,
                         normalize: bool = False) -> jax.Array:
    """Pallas implementation of InvertedLre.calculate_subject_activation."""
    B, H = object_activations.shape
    R = s.shape[0]
    assert u.shape == (H, R) and v.shape == (H, R) and bias.shape == (H,)

    # --- one-time parameter prep (params are frozen) -------------------------
    inv_s = (1.0 / s.astype(jnp.float32)).astype(v.dtype)
    vst = (v * inv_s[None, :]).T                                          # (R, H)
    bias2 = bias.reshape(1, H)
    # TODO(synk): for full-rank LREs (R >= H/2) fold W = v @ diag(1/s) @ u.T at
    # prep time and run only the second kernel on W.T -- halves HBM traffic.

    w_itemsize = jnp.dtype(u.dtype).itemsize
    act_itemsize = jnp.dtype(object_activations.dtype).itemsize

    # ---- kernel 1: rank-space projection; "parallel" grid over R tiles ------
    tR = _pick_lane_tile(H, R, w_itemsize)
    grid_r = R // tR
    cost1 = pl.CostEstimate(
        flops=2 * H * R + B * H,
        transcendentals=0,
        bytes_accessed=H * R * w_itemsize + (B * H + H) * act_itemsize + R * 4)
    q = pl.pallas_call(
        functools.partial(_obj_to_rank_kernel, inv_batch=1.0 / B),
        out_shape=jax.ShapeDtypeStruct((1, R), jnp.float32),
        grid=(grid_r,),
        in_specs=[
            pl.BlockSpec((B, H), lambda k: (0, 0)),      # activations (resident)
            pl.BlockSpec((1, H), lambda k: (0, 0)),      # bias
            pl.BlockSpec((H, tR), lambda k: (0, k)),     # u tile (pipelined)
        ],
        out_specs=pl.BlockSpec((1, tR), lambda k: (0, k)),
        compiler_params=pltpu.CompilerParams(
            dimension_semantics=("parallel",),
            vmem_limit_bytes=32 * 1024 * 1024),
        cost_estimate=cost1,
    )(object_activations, bias2, u)

    # ---- kernel 2: back-projection to H; "parallel" grid over H tiles -------
    tH = _pick_lane_tile(R, H, w_itemsize)
    grid_h = H // tH
    cost2 = pl.CostEstimate(
        flops=2 * R * H,
        transcendentals=0,
        bytes_accessed=R * H * w_itemsize + R * 4 + H * act_itemsize)
    vec = pl.pallas_call(
        _rank_to_subject_kernel,
        out_shape=jax.ShapeDtypeStruct((1, H), object_activations.dtype),
        grid=(grid_h,),
        in_specs=[
            pl.BlockSpec((1, R), lambda j: (0, 0)),      # q (resident)
            pl.BlockSpec((R, tH), lambda j: (0, j)),     # vst tile (pipelined)
        ],
        out_specs=pl.BlockSpec((1, tH), lambda j: (0, j)),
        compiler_params=pltpu.CompilerParams(
            dimension_semantics=("parallel",),
            vmem_limit_bytes=32 * 1024 * 1024),
        cost_estimate=cost2,
    )(q, vst)

    out = vec[0]                                                          # (H,)

    if normalize:
        # Full-vector norm cannot live on the tiled "parallel" output axis;
        # done in the wrapper.  No epsilon, matching the PyTorch reference.
        out32 = out.astype(jnp.float32)
        out = (out32 / jnp.linalg.norm(out32)).astype(out.dtype)

    return out


def _reference(object_activations, u, s, v, bias, normalize=False):
    unbiased = object_activations - bias[None, :]
    vec = (v @ jnp.diag(1.0 / s) @ (u.T @ unbiased.T)).mean(axis=1)
    if normalize:
        vec = vec / jnp.linalg.norm(vec)
    return vec


if __name__ == "__main__":
    # Small deterministic SVD-style factors.  H = 128 keeps the output slab
    # lane-dense; R = 16 exercises the full-dim (non-128) block path.
    B, H, R = 8, 128, 16

    key = jax.random.PRNGKey(0)
    k_obj, k_u, k_s, k_v, k_b = jax.random.split(key, 5)

    object_activations = jax.random.normal(k_obj, (B, H), dtype=jnp.float32)
    u = jax.random.normal(k_u, (H, R), dtype=jnp.float32)
    # keep singular values away from zero so 1/s is well-conditioned
    s = jax.random.uniform(k_s, (R,), dtype=jnp.float32, minval=0.5, maxval=2.0)
    v = jax.random.normal(k_v, (H, R), dtype=jnp.float32)
    bias = jax.random.normal(k_b, (H,), dtype=jnp.float32)

    out = jax.block_until_ready(
        inverted_lre_forward(object_activations, u, s, v, bias, normalize=False))
    out_norm = jax.block_until_ready(
        inverted_lre_forward(object_activations, u, s, v, bias, normalize=True))

    ref = _reference(object_activations, u, s, v, bias, normalize=False)
    ref_norm = _reference(object_activations, u, s, v, bias, normalize=True)

    assert out.shape == (H,)
    assert out.dtype == object_activations.dtype
    assert jnp.allclose(out, ref, atol=1e-4, rtol=1e-4)
    assert jnp.allclose(out_norm, ref_norm, atol=1e-4, rtol=1e-4)

    print("KERNEL_OK")
</pallas_src>

<mosaic_0001>
module attributes {stable_mosaic.version = 11 : i64} {
  func.func @_obj_to_rank_kernel(%arg0: i32, %arg1: memref<8x128xf32, #tpu.memory_space<vmem>>, %arg2: memref<1x128xf32, #tpu.memory_space<vmem>>, %arg3: memref<128x16xf32, #tpu.memory_space<vmem>>, %arg4: memref<1x16xf32, #tpu.memory_space<vmem>>) attributes {dimension_semantics = [#tpu.dimension_semantics<parallel>], iteration_bounds = array<i64: 1>, scalar_prefetch = 0 : i64, scratch_operands = 0 : i64, tpu.core_type = #tpu.core_type<tc>, window_params = [{pipeline_mode = #tpu.pipeline_mode<synchronous>, transform_indices = @transform_0, window_bounds = array<i64: 8, 128>}, {pipeline_mode = #tpu.pipeline_mode<synchronous>, transform_indices = @transform_1, window_bounds = array<i64: 1, 128>}, {transform_indices = @transform_2, window_bounds = array<i64: 128, 16>}, {transform_indices = @transform_3, window_bounds = array<i64: 1, 16>}]} {
    %c0 = arith.constant 0 : index
    %c0_0 = arith.constant 0 : index
    %0 = vector.load %arg1[%c0, %c0_0] : memref<8x128xf32, #tpu.memory_space<vmem>>, vector<8x128xf32>
    %cst = arith.constant dense<0.000000e+00> : vector<128xf32>
    %1 = vector.multi_reduction <add>, %0, %cst [0] : vector<8x128xf32> to vector<128xf32>
    %2 = vector.shape_cast %1 : vector<128xf32> to vector<1x128xf32>
    %cst_1 = arith.constant 1.250000e-01 : f32
    %3 = vector.broadcast %cst_1 : f32 to vector<1x128xf32>
    %4 = arith.mulf %2, %3 : vector<1x128xf32>
    %c0_2 = arith.constant 0 : index
    %c0_3 = arith.constant 0 : index
    %5 = vector.load %arg2[%c0_2, %c0_3] : memref<1x128xf32, #tpu.memory_space<vmem>>, vector<1x128xf32>
    %6 = arith.subf %4, %5 : vector<1x128xf32>
    %c0_4 = arith.constant 0 : index
    %c0_5 = arith.constant 0 : index
    %7 = vector.load %arg3[%c0_4, %c0_5] : memref<128x16xf32, #tpu.memory_space<vmem>>, vector<128x16xf32>
    %cst_6 = arith.constant dense<0.000000e+00> : vector<1x16xf32>
    %8 = tpu.matmul %6, %7, %cst_6 {dimension_numbers = #tpu.dot_dimension_numbers<[1], [0], [0], [1], [0, 0, 1, 1], [], []>} : vector<1x128xf32>, vector<128x16xf32>, vector<1x16xf32> -> vector<1x16xf32>
    %c0_7 = arith.constant 0 : index
    %c0_8 = arith.constant 0 : index
    %9 = vector.load %arg4[%c0_7, %c0_8] : memref<1x16xf32, #tpu.memory_space<vmem>>, vector<1x16xf32>
    tpu.vector_store %arg4[%c0_7, %c0_8], %8 {strides = array<i32>} : memref<1x16xf32, #tpu.memory_space<vmem>>, vector<1x16xf32>,
    return
  }
  func.func @transform_0(%arg0: i32) -> (i32, i32) {
    %c0_i32 = arith.constant 0 : i32
    %c0_i32_0 = arith.constant 0 : i32
    %c0_i32_1 = arith.constant 0 : i32
    return %c0_i32, %c0_i32_0 : i32, i32
  }
  func.func @transform_1(%arg0: i32) -> (i32, i32) {
    %c0_i32 = arith.constant 0 : i32
    %c0_i32_0 = arith.constant 0 : i32
    %c0_i32_1 = arith.constant 0 : i32
    return %c0_i32, %c0_i32_0 : i32, i32
  }
  func.func @transform_2(%arg0: i32) -> (i32, i32) {
    %c0_i32 = arith.constant 0 : i32
    %c0_i32_0 = arith.constant 0 : i32
    return %c0_i32, %arg0 : i32, i32
  }
  func.func @transform_3(%arg0: i32) -> (i32, i32) {
    %c0_i32 = arith.constant 0 : i32
    %c0_i32_0 = arith.constant 0 : i32
    return %c0_i32, %arg0 : i32, i32
  }
}

</mosaic_0001>

<llo_original>
// kernel: tpu_custom_call.1
$region0: #{tpu_custom_call.1}
  #allocation0 [shape = 'u32[]', space=smem, size = 0x4, offset = 0x4, fixed_abs, tag = 'smem constant byte address 0x4 - core index']
  #allocation1 [shape = 'u32[144,128]{1,0:T(1,128)}', space=vmem, size = 0x12000, scoped, tag = 'internal scratch']
  %s0 = inlined_call_operand.vmem [shape: f32[8,128], index: 0, kind: input, shape index: {}]
  %s1 = inlined_call_operand.vmem [shape: f32[1,128], index: 1, kind: input, shape index: {}]
  %s2 = inlined_call_operand.vmem [shape: f32[128,16], index: 2, kind: input, shape index: {}]
  %s3 = inlined_call_operand.hbm [shape: f32[1,16], index: 3, kind: output, shape index: {}]
  %s4 = sld [smem:[#allocation0]]
  $region22: #{tpu_custom_call.1} parent=0
    _
  %s6 = ssub.s32 1, %s4
  %s7 = scalar_select 0, %s6, %s4
  $region1: #{tpu_custom_call.1} parent=0
    #allocation2 [shape = 'u8[512]{0}', space=vmem, size = 0x400, scoped, tag = 'output window, operand 0, single buffered']
    #allocation3 [shape = 's32[1]{0}', space=sflag, size = 0x4, scoped, tag = 'scoped memory for tpu_custom_call.1']
    %8 = vsyncpa [#allocation3], 0
    // Predicated region
    $region2: #{tpu_custom_call.1} parent=1 // pred_check
      _
    $region3: #{tpu_custom_call.1} parent=1 // pred_check_branch
      %10 = sbr.rel (0) target = $region5
    $region4: #{tpu_custom_call.1} parent=1 // pred_region
      _
    $region5: #{tpu_custom_call.1} parent=1 // pred_fallthru
      _
    // Predicated region
    $region6: #{tpu_custom_call.1} parent=1 // pred_check
      _
    $region7: #{tpu_custom_call.1} parent=1 // pred_check_branch
      %12 = sbr.rel (0) target = $region9
    $region8: #{tpu_custom_call.1} parent=1 // pred_region
      _
    $region9: #{tpu_custom_call.1} parent=1 // pred_fallthru
      _
    // Predicated region
    $region10: #{tpu_custom_call.1} parent=1 // pred_check
      _
    $region11: #{tpu_custom_call.1} parent=1 // pred_check_branch
      %14 = sbr.rel (0) target = $region13
    $region12: #{tpu_custom_call.1} parent=1 // pred_region
      _
    $region13: #{tpu_custom_call.1} parent=1 // pred_fallthru
      _
    %v15 = vld [vmem:[%s0] sm:$0xff]
    %v16 = vrot.slane %v15, 4
    %v17 = vadd.f32 %v15, %v16
    %v18 = vrot.slane %v17, 2
    %v19 = vadd.f32 %v17, %v18
    %v20 = vrot.slane %v19, 1
    %v21 = vadd.f32 %v19, %v20
    %v22 = vmul.f32 %v21, 0.125
    %v23 = vld [vmem:[%s1] sm:$0x1]
    %v24 = vsub.f32 %v22, %v23
    %v25 = vld [vmem:[%s2] sm:$0xff]
    %v26 = vld [vmem:[%s2 + $0x8] sm:$0xff]
    %v27 = vld [vmem:[%s2 + $0x10] sm:$0xff]
    %v28 = vld [vmem:[%s2 + $0x18] sm:$0xff]
    %v29 = vld [vmem:[%s2 + $0x20] sm:$0xff]
    %v30 = vld [vmem:[%s2 + $0x28] sm:$0xff]
    %v31 = vld [vmem:[%s2 + $0x30] sm:$0xff]
    %v32 = vld [vmem:[%s2 + $0x38] sm:$0xff]
    %v33 = vld [vmem:[%s2 + $0x40] sm:$0xff]
    %v34 = vld [vmem:[%s2 + $0x48] sm:$0xff]
    %v35 = vld [vmem:[%s2 + $0x50] sm:$0xff]
    %v36 = vld [vmem:[%s2 + $0x58] sm:$0xff]
    %v37 = vld [vmem:[%s2 + $0x60] sm:$0xff]
    %v38 = vld [vmem:[%s2 + $0x68] sm:$0xff]
    %v39 = vld [vmem:[%s2 + $0x70] sm:$0xff]
    %v40 = vld [vmem:[%s2 + $0x78] sm:$0xff]
    %41 = vmatprep.subr.mxu0 0.0
    %42 = vmatpush1.msra.mxu0 %v40
    %43 = vmatprep.subr.mxu0 0.0
    %44 = vmatpush1.msra.mxu0 %v39
    %45 = vmatprep.subr.mxu0 0.0
    %46 = vmatpush1.msra.mxu0 %v38
    %47 = vmatprep.subr.mxu0 0.0
    %48 = vmatpush1.msra.mxu0 %v37
    %49 = vmatprep.subr.mxu0 0.0
    %50 = vmatpush1.msra.mxu0 %v36
    %51 = vmatprep.subr.mxu0 0.0
    %52 = vmatpush1.msra.mxu0 %v35
    %53 = vmatprep.subr.mxu0 0.0
    %54 = vmatpush1.msra.mxu0 %v34
    %55 = vmatprep.subr.mxu0 0.0
    %56 = vmatpush1.msra.mxu0 %v33
    %57 = vmatprep.subr.mxu0 0.0
    %58 = vmatpush1.msra.mxu0 %v32
    %59 = vmatprep.subr.mxu0 0.0
    %60 = vmatpush1.msra.mxu0 %v31
    %61 = vmatprep.subr.mxu0 0.0
    %62 = vmatpush1.msra.mxu0 %v30
    %63 = vmatprep.subr.mxu0 0.0
    %64 = vmatpush1.msra.mxu0 %v29
    %65 = vmatprep.subr.mxu0 0.0
    %66 = vmatpush1.msra.mxu0 %v28
    %67 = vmatprep.subr.mxu0 0.0
    %68 = vmatpush1.msra.mxu0 %v27
    %69 = vmatprep.subr.mxu0 0.0
    %70 = vmatpush1.msra.mxu0 %v26
    %71 = vmatprep.subr.mxu0 0.0
    %72 = vmatpush1.msra.mxu0 %v25
    %73 = vmatprep.subr.mxu0 0.0
    %74 = vmatpush2.msra.mxu0 0.0
    %75 = vmatprep.subr.mxu0 0.0
    %76 = vmatpush2.msra.mxu0 0.0
    %77 = vmatprep.subr.mxu0 0.0
    %78 = vmatpush2.msra.mxu0 0.0
    %79 = vmatprep.subr.mxu0 0.0
    %80 = vmatpush2.msra.mxu0 0.0
    %81 = vmatprep.subr.mxu0 0.0
    %82 = vmatpush2.msra.mxu0 0.0
    %83 = vmatprep.subr.mxu0 0.0
    %84 = vmatpush2.msra.mxu0 0.0
    %85 = vmatprep.subr.mxu0 0.0
    %86 = vmatpush2.msra.mxu0 0.0
    %87 = vmatprep.subr.mxu0 0.0
    %88 = vmatpush2.msra.mxu0 0.0
    %89 = vmatprep.subr.mxu0 0.0
    %90 = vmatpush2.msra.mxu0 0.0
    %91 = vmatprep.subr.mxu0 0.0
    %92 = vmatpush2.msra.mxu0 0.0
    %93 = vmatprep.subr.mxu0 0.0
    %94 = vmatpush2.msra.mxu0 0.0
    %95 = vmatprep.subr.mxu0 0.0
    %96 = vmatpush2.msra.mxu0 0.0
    %97 = vmatprep.subr.mxu0 0.0
    %98 = vmatpush2.msra.mxu0 0.0
    %99 = vmatprep.subr.mxu0 0.0
    %100 = vmatpush2.msra.mxu0 0.0
    %101 = vmatprep.subr.mxu0 0.0
    %102 = vmatpush2.msra.mxu0 0.0
    %103 = vmatprep.subr.mxu0 0.0
    %104 = vmatpush2.msra.mxu0 0.0
    %105 = vmatprep.mubr.f32.mxu0 0.0
    %106 = vmatmul.mubr.f32.gmra.mxu0 %v24
    %v107 = vpop.f32.mrf.mxu0
    %v108 = vadd.f32 0.0, %v107
    %v109 = vpop.f32.mrf.mxu0
    %110 = vdwg.mxu0
    %vm111 = vcmask 122880
    %112 = vst.msk [vmem:[#allocation2] sm:$0x1] %vm111, %v108
    // Predicated region
    $region14: #{tpu_custom_call.1} parent=1 // pred_check
      _
    $region15: #{tpu_custom_call.1} parent=1 // pred_check_branch
      %114 = sbr.rel (0) target = $region17
    $region16: #{tpu_custom_call.1} parent=1 // pred_region
      %s116 = ssub.s32 16, 16
      %117 = vsyncadd [#allocation3], %s116
      %s119 = sshll.u32 [#allocation2], 4
      %s120 = int_to_ptr.vmem [resolvable:$true] %s119
      %122 = dma.vmem_to_hbm [thread:$0]  %s120, 16, %s3, [#allocation3]
    $region17: #{tpu_custom_call.1} parent=1 // pred_fallthru
      _
    // Predicated region
    $region18: #{tpu_custom_call.1} parent=1 // pred_check
      _
    $region19: #{tpu_custom_call.1} parent=1 // pred_check_branch
      %124 = sbr.rel (0) target = $region21
    $region20: #{tpu_custom_call.1} parent=1 // pred_region
      %125 = dma.done [#allocation3], 16
    $region21: #{tpu_custom_call.1} parent=1 // pred_fallthru
      _
    %126 = vsyncpa [#allocation3], 1

</llo_original>
